<compile_context>
chip_gen: v7x
topology: tpu7x:2x2x1
jax: 0.10.0
libtpu: 0.0.40
codegen_flags: <defaults>
</compile_context>

<pallas_src>
import math
import functools

import jax
import jax.numpy as jnp
from jax import lax
from jax.experimental import pallas as pl
from jax.experimental.pallas import tpu as pltpu

_LANES = 128


def _round_up(a: int, m: int) -> int:
    return ((a + m - 1) // m) * m


def _gelu_kernel(x_ref, o_ref, *, approximate: bool):
    x = x_ref[...].astype(jnp.float32)
    if approximate:
        # 0.5 * x * (1 + tanh(sqrt(2/pi) * (x + 0.044715 * x^3)))  (tanh -> EUP)
        c = math.sqrt(2.0 / math.pi)
        inner = c * (x + 0.044715 * (x * x * x))
        y = 0.5 * x * (1.0 + jnp.tanh(inner))
    else:
        # 0.5 * x * (1 + erf(x / sqrt(2)))
        # NOTE: erf lowers to a VPU polynomial; on v7x/bf16 this can become the
        # binding slot, but approximate=False semantics require exact erf.
        y = 0.5 * x * (1.0 + lax.erf(x * (1.0 / math.sqrt(2.0))))
    o_ref[...] = y.astype(o_ref.dtype)


def _gelu_2d(x2d: jax.Array, approximate: bool, block_rows: int) -> jax.Array:
    """GELU over a lane-dense (rows, 128) slab."""
    rows, lanes = x2d.shape
    dtype = x2d.dtype

    pad_rows = 0
    if rows <= 32:
        # Tiny slab: single block equal to the (row-padded) full array.
        tile_rows = _round_up(max(rows, 8), 8)
        pad_rows = tile_rows - rows
        if pad_rows:
            x2d = jnp.pad(x2d, ((0, pad_rows), (0, 0)))  # <= 7 rows, negligible
    else:
        # Large blocks (multiple of 32 sublanes), but aim for >= 2 grid steps
        # so both v7x TensorCores get work. Partial trailing block is masked
        # by Pallas -- no whole-tensor padding copy.
        tile_rows = min(block_rows, _round_up(pl.cdiv(rows, 2), 32))
        tile_rows = max(32, (tile_rows // 32) * 32)

    total_rows = rows + pad_rows
    grid = (pl.cdiv(total_rows, tile_rows),)

    n = rows * lanes
    itemsize = jnp.dtype(dtype).itemsize
    cost = pl.CostEstimate(
        flops=8 * n,
        transcendentals=(n if approximate else 0),
        bytes_accessed=2 * n * itemsize,
    )

    kernel = functools.partial(_gelu_kernel, approximate=approximate)

    out = pl.pallas_call(
        kernel,
        out_shape=jax.ShapeDtypeStruct((total_rows, lanes), dtype),
        grid_spec=pltpu.PrefetchScalarGridSpec(
            num_scalar_prefetch=0,
            grid=grid,
            in_specs=[pl.BlockSpec((tile_rows, lanes), lambda i: (i, 0))],
            out_specs=pl.BlockSpec((tile_rows, lanes), lambda i: (i, 0)),
        ),
        compiler_params=pltpu.CompilerParams(
            dimension_semantics=("parallel",),
            vmem_limit_bytes=32 * 1024 * 1024,
        ),
        cost_estimate=cost,
    )(x2d)

    if pad_rows:
        out = out[:rows]
    return out


def custom_gelu(x: jax.Array, approximate: bool = True, *, block_rows: int = 4096) -> jax.Array:
    """Elementwise GELU matching the PyTorch CustomGELU forward."""
    orig_shape = x.shape
    dtype = x.dtype
    n = x.size
    if n == 0:
        return x

    flat = x.reshape(-1)
    rows = n // _LANES
    rem = n - rows * _LANES

    pieces = []
    if rows:
        # Zero-copy view of the 128-aligned prefix (no padding materialized).
        main = flat[: rows * _LANES].reshape(rows, _LANES)
        pieces.append(_gelu_2d(main, approximate, block_rows).reshape(-1))
    if rem:
        # Ragged tail (< 128 elements): one tiny (32, 128) tile call.
        tail = flat[rows * _LANES:]
        tail_tile = jnp.zeros((32, _LANES), dtype=dtype).at[0, :rem].set(tail)
        pieces.append(_gelu_2d(tail_tile, approximate, block_rows)[0, :rem])

    out_flat = pieces[0] if len(pieces) == 1 else jnp.concatenate(pieces)
    return out_flat.reshape(orig_shape)


def _gelu_ref(x, approximate=True):
    x = x.astype(jnp.float32)
    if approximate:
        c = math.sqrt(2.0 / math.pi)
        return 0.5 * x * (1.0 + jnp.tanh(c * (x + 0.044715 * x**3)))
    return 0.5 * x * (1.0 + lax.erf(x / math.sqrt(2.0)))


if __name__ == "__main__":
    key = jax.random.PRNGKey(0)
    k1, k2, k3 = jax.random.split(key, 3)

    # 1) Typical NCHW activation tensor (numel % 128 == 0 -> zero-copy path).
    x = jax.random.normal(k1, (2, 4, 16, 16), dtype=jnp.float32)

    y_approx = jax.block_until_ready(custom_gelu(x, approximate=True))
    assert y_approx.shape == x.shape and y_approx.dtype == x.dtype
    assert jnp.allclose(y_approx, _gelu_ref(x, approximate=True), atol=1e-5, rtol=1e-5)

    y_exact = jax.block_until_ready(custom_gelu(x, approximate=False))
    assert jnp.allclose(y_exact, _gelu_ref(x, approximate=False), atol=1e-5, rtol=1e-5)

    # 2) Larger tensor -> multi-step grid (exercises big-block path, grid >= 2).
    x_big = jax.random.normal(k2, (4, 8, 32, 32), dtype=jnp.float32)
    y_big = jax.block_until_ready(custom_gelu(x_big, approximate=True))
    assert jnp.allclose(y_big, _gelu_ref(x_big, approximate=True), atol=1e-5, rtol=1e-5)

    # 3) Ragged size (numel % 128 != 0) -> tail-tile path, no full-tensor pad.
    x_ragged = jax.random.normal(k3, (3, 5, 7), dtype=jnp.float32)
    y_ragged = jax.block_until_ready(custom_gelu(x_ragged, approximate=True))
    assert y_ragged.shape == x_ragged.shape
    assert jnp.allclose(y_ragged, _gelu_ref(x_ragged, approximate=True), atol=1e-5, rtol=1e-5)

    # 4) bf16 input (output dtype preserved; compare against f32 ref loosely).
    x_bf16 = jax.random.normal(k1, (2, 4, 16, 16), dtype=jnp.bfloat16)
    y_bf16 = jax.block_until_ready(custom_gelu(x_bf16, approximate=True))
    assert y_bf16.dtype == jnp.bfloat16
    assert jnp.allclose(y_bf16.astype(jnp.float32),
                        _gelu_ref(x_bf16.astype(jnp.float32), approximate=True),
                        atol=2e-2, rtol=2e-2)

    print("KERNEL_OK")
</pallas_src>

<mosaic_0001>
module attributes {stable_mosaic.version = 11 : i64} {
  func.func @_gelu_kernel(%arg0: i32, %arg1: memref<16x128xf32, #tpu.memory_space<vmem>>, %arg2: memref<16x128xf32, #tpu.memory_space<vmem>>) attributes {dimension_semantics = [#tpu.dimension_semantics<parallel>], iteration_bounds = array<i64: 1>, scalar_prefetch = 0 : i64, scratch_operands = 0 : i64, tpu.core_type = #tpu.core_type<tc>, window_params = [{transform_indices = @transform_0, window_bounds = array<i64: 16, 128>}, {transform_indices = @transform_1, window_bounds = array<i64: 16, 128>}]} {
    %c0 = arith.constant 0 : index
    %c0_0 = arith.constant 0 : index
    %0 = vector.load %arg1[%c0, %c0_0] : memref<16x128xf32, #tpu.memory_space<vmem>>, vector<16x128xf32>
    %1 = arith.mulf %0, %0 : vector<16x128xf32>
    %2 = arith.mulf %1, %0 : vector<16x128xf32>
    %cst = arith.constant 4.471500e-02 : f32
    %3 = vector.broadcast %cst : f32 to vector<16x128xf32>
    %4 = arith.mulf %3, %2 : vector<16x128xf32>
    %5 = arith.addf %0, %4 : vector<16x128xf32>
    %cst_1 = arith.constant 0.797884583 : f32
    %6 = vector.broadcast %cst_1 : f32 to vector<16x128xf32>
    %7 = arith.mulf %6, %5 : vector<16x128xf32>
    %cst_2 = arith.constant 5.000000e-01 : f32
    %8 = vector.broadcast %cst_2 : f32 to vector<16x128xf32>
    %9 = arith.mulf %8, %0 : vector<16x128xf32>
    %10 = math.tanh %7 : vector<16x128xf32>
    %cst_3 = arith.constant 1.000000e+00 : f32
    %11 = vector.broadcast %cst_3 : f32 to vector<16x128xf32>
    %12 = arith.addf %11, %10 : vector<16x128xf32>
    %13 = arith.mulf %9, %12 : vector<16x128xf32>
    %c0_4 = arith.constant 0 : index
    %c0_5 = arith.constant 0 : index
    %14 = vector.load %arg2[%c0_4, %c0_5] : memref<16x128xf32, #tpu.memory_space<vmem>>, vector<16x128xf32>
    tpu.vector_store %arg2[%c0_4, %c0_5], %13 {strides = array<i32>} : memref<16x128xf32, #tpu.memory_space<vmem>>, vector<16x128xf32>,
    return
  }
  func.func @transform_0(%arg0: i32) -> (i32, i32) {
    %c0_i32 = arith.constant 0 : i32
    %c0_i32_0 = arith.constant 0 : i32
    return %arg0, %c0_i32 : i32, i32
  }
  func.func @transform_1(%arg0: i32) -> (i32, i32) {
    %c0_i32 = arith.constant 0 : i32
    %c0_i32_0 = arith.constant 0 : i32
    return %arg0, %c0_i32 : i32, i32
  }
}

</mosaic_0001>

<llo_original>
// kernel: tpu_custom_call.1
$region0: #{tpu_custom_call.1}
  #allocation0 [shape = 'u32[]', space=smem, size = 0x4, offset = 0x4, fixed_abs, tag = 'smem constant byte address 0x4 - core index']
  #allocation1 [shape = 'u32[144,128]{1,0:T(1,128)}', space=vmem, size = 0x12000, scoped, tag = 'internal scratch']
  %s0 = inlined_call_operand.hbm [shape: f32[16,128], index: 0, kind: input, shape index: {}]
  %s1 = inlined_call_operand.hbm [shape: f32[16,128], index: 1, kind: output, shape index: {}]
  %s2 = sld [smem:[#allocation0]]
  $region18: #{tpu_custom_call.1} parent=0
    _
  %s4 = ssub.s32 1, %s2
  %s5 = scalar_select 0, %s4, %s2
  $region1: #{tpu_custom_call.1} parent=0
    #allocation2 [shape = 'u8[8192]{0}', space=vmem, size = 0x2000, scoped, tag = 'input window, operand 0, single buffered']
    #allocation3 [shape = 's32[1]{0}', space=sflag, size = 0x4, scoped, tag = 'scoped memory for tpu_custom_call.1']
    #allocation4 [shape = 's32[1]{0}', space=sflag, size = 0x4, scoped, tag = 'scoped memory for tpu_custom_call.1']
    #allocation5 [shape = 'u8[8192]{0}', space=vmem, size = 0x2000, scoped, tag = 'output window, operand 0, single buffered']
    %6 = vsyncpa [#allocation3], 0
    %7 = vsyncpa [#allocation4], 0
    // Predicated region
    $region2: #{tpu_custom_call.1} parent=1 // pred_check
      _
    $region3: #{tpu_custom_call.1} parent=1 // pred_check_branch
      %9 = sbr.rel (0) target = $region5
    $region4: #{tpu_custom_call.1} parent=1 // pred_region
      %s11 = ssub.s32 256, 256
      %12 = vsyncadd [#allocation3], %s11
      %s13 = sshll.u32 [#allocation2], 4
      %s14 = int_to_ptr.vmem [resolvable:$true] %s13
      %19 = dma.hbm_to_vmem [thread:$0]  %s0, 256, %s14, [#allocation3], 128, 128, 8
    $region5: #{tpu_custom_call.1} parent=1 // pred_fallthru
      _
    // Predicated region
    $region6: #{tpu_custom_call.1} parent=1 // pred_check
      _
    $region7: #{tpu_custom_call.1} parent=1 // pred_check_branch
      %21 = sbr.rel (0) target = $region9
    $region8: #{tpu_custom_call.1} parent=1 // pred_region
      %22 = dma.done [#allocation3], 256
    $region9: #{tpu_custom_call.1} parent=1 // pred_fallthru
      _
    %v23 = vld [vmem:[#allocation2] sm:$0xff]
    %v24 = vld [vmem:[#allocation2 + $0x8] sm:$0xff]
    %v25 = vmul.f32 %v23, %v23
    %v26 = vmul.f32 %v24, %v24
    %v27 = vmul.f32 %v25, %v23
    %v28 = vmul.f32 %v26, %v24
    %v29 = vmul.f32 %v27, 0.044715
    %v30 = vmul.f32 %v28, 0.044715
    %v31 = vadd.f32 %v23, %v29
    %v32 = vadd.f32 %v24, %v30
    %v33 = vmul.f32 %v31, 0.7978846
    %v34 = vmul.f32 %v32, 0.7978846
    %v35 = vmul.f32 %v23, 0.5
    %v36 = vmul.f32 %v24, 0.5
    %v37 = vtanh.pop %v33
    %v38 = vtanh.pop %v34
    %v39 = vadd.f32 %v37, 1.0
    %v40 = vadd.f32 %v38, 1.0
    %v41 = vmul.f32 %v35, %v39
    %v42 = vmul.f32 %v36, %v40
    %43 = vst [vmem:[#allocation5] sm:$0xff] %v41
    %44 = vst [vmem:[#allocation5 + $0x8] sm:$0xff] %v42
    // Predicated region
    $region10: #{tpu_custom_call.1} parent=1 // pred_check
      _
    $region11: #{tpu_custom_call.1} parent=1 // pred_check_branch
      %46 = sbr.rel (0) target = $region13
    $region12: #{tpu_custom_call.1} parent=1 // pred_region
      %s48 = ssub.s32 256, 256
      %49 = vsyncadd [#allocation4], %s48
      %s50 = sshll.u32 [#allocation5], 4
      %s51 = int_to_ptr.vmem [resolvable:$true] %s50
      %56 = dma.vmem_to_hbm [thread:$0]  %s51, 256, %s1, [#allocation4], 128, 128, 8
    $region13: #{tpu_custom_call.1} parent=1 // pred_fallthru
      _
    // Predicated region
    $region14: #{tpu_custom_call.1} parent=1 // pred_check
      _
    $region15: #{tpu_custom_call.1} parent=1 // pred_check_branch
      %58 = sbr.rel (0) target = $region17
    $region16: #{tpu_custom_call.1} parent=1 // pred_region
      %59 = dma.done [#allocation4], 256
    $region17: #{tpu_custom_call.1} parent=1 // pred_fallthru
      _
    %60 = vsyncpa [#allocation3], 1
    %61 = vsyncpa [#allocation4], 1

</llo_original>
